<compile_context>
chip_gen: v7x
topology: tpu7x:2x2x1
jax: 0.10.0
libtpu: 0.0.40
codegen_flags: <defaults>
</compile_context>

<pallas_src>
import functools

import jax
import jax.numpy as jnp
from jax.experimental import pallas as pl
from jax.experimental.pallas import tpu as pltpu


# ----------------------------- helpers ---------------------------------------
def _round_up(n, m):
    return ((n + m - 1) // m) * m


def _packed_layout(d_obs, hidden):
    """Layout of the packed parameter buffer (all sections 8-row aligned).

    rows [o_w1,  o_w1+H)  cols [0, D) : W1^T  (fc1 weight as (H, D))
    rows [o_w2,  o_w2+H)  cols [0, H) : W2^T  (fc2 weight as (H, H))
    rows [o_vec, o_vec+H) col 0       : b1    (column vector)
                          col 1       : b2
                          col 2       : w3    (fc3 weight as a column)
         row  o_vec,      col 3       : b3    (scalar)
    """
    lane = max(d_obs, hidden, 8)
    o_w1 = 0
    o_w2 = o_w1 + _round_up(hidden, 8)
    o_vec = o_w2 + _round_up(hidden, 8)
    rows = o_vec + _round_up(hidden, 8)
    return o_w1, o_w2, o_vec, rows, lane


def pack_params(params, d_obs, hidden):
    """Pack (w1,b1,w2,b2,w3,b3) into one (rows, lane) f32 buffer.  Call ONCE at setup."""
    w1, b1, w2, b2, w3, b3 = params  # w1:(D,H) b1:(1,H) w2:(H,H) b2:(1,H) w3:(H,1) b3:(1,1)
    o_w1, o_w2, o_vec, rows, lane = _packed_layout(d_obs, hidden)
    buf = jnp.zeros((rows, lane), jnp.float32)
    buf = buf.at[o_w1:o_w1 + hidden, 0:d_obs].set(w1.astype(jnp.float32).T)   # W1^T (H, D)
    buf = buf.at[o_w2:o_w2 + hidden, 0:hidden].set(w2.astype(jnp.float32).T)  # W2^T (H, H)
    buf = buf.at[o_vec:o_vec + hidden, 0].set(b1.reshape(hidden).astype(jnp.float32))
    buf = buf.at[o_vec:o_vec + hidden, 1].set(b2.reshape(hidden).astype(jnp.float32))
    buf = buf.at[o_vec:o_vec + hidden, 2].set(w3.reshape(hidden).astype(jnp.float32))
    buf = buf.at[o_vec, 3].set(b3.reshape(()).astype(jnp.float32))
    return buf


# ----------------------------- Pallas kernel ---------------------------------
def _critic_mlp_kernel(xt_ref, p_ref, o_ref, *, d_obs, hidden, layout):
    o_w1, o_w2, o_vec, _, _ = layout

    xt = xt_ref[...]                                   # (D, TB) f32, batch on lanes

    # Static, sublane-aligned slices of the VMEM-resident packed parameter buffer.
    w1t = p_ref[o_w1:o_w1 + hidden, 0:d_obs]           # (H, D)
    w2t = p_ref[o_w2:o_w2 + hidden, 0:hidden]          # (H, H)
    b1 = p_ref[o_vec:o_vec + hidden, 0:1]              # (H, 1), broadcast over lanes
    b2 = p_ref[o_vec:o_vec + hidden, 1:2]              # (H, 1)
    w3 = p_ref[o_vec:o_vec + hidden, 2:3]              # (H, 1)
    b3 = p_ref[o_vec:o_vec + 1, 3:4]                   # (1, 1)

    # Feature-major MLP: activations stay (H, TB) -> full 128-lane vregs.
    h1 = jnp.tanh(jnp.dot(w1t, xt, preferred_element_type=jnp.float32) + b1)   # (H, TB)
    h2 = jnp.tanh(jnp.dot(w2t, h1, preferred_element_type=jnp.float32) + b2)   # (H, TB)
    # fc3 (H -> 1): VPU multiply + sublane (XLU) reduction; keeps output lane-dense.
    v = jnp.sum(h2 * w3, axis=0, keepdims=True) + b3                            # (1, TB)
    o_ref[...] = v.astype(o_ref.dtype)


def _choose_tile(batch, block_b):
    """Lane-dense batch tiles (multiples of 128); >=2 grid steps for large batches."""
    if batch < 256:
        return batch, 1                                # single full-extent tile
    tb = _round_up(min(max(block_b, 128), pl.cdiv(batch, 2)), 128)
    nt = pl.cdiv(batch, tb)
    if nt > 1 and nt % 2 == 1:                         # prefer an even split across v7x's 2 TCs
        tb2 = _round_up(pl.cdiv(batch, nt + 1), 128)
        nt2 = pl.cdiv(batch, tb2)
        if nt2 >= 2 and nt2 % 2 == 0:
            tb, nt = tb2, nt2
    return tb, nt


@functools.partial(jax.jit, static_argnames=("obs_dim", "hidden_dim", "block_b"))
def critic_mlp_forward(x, packed, *, obs_dim, hidden_dim, block_b=4096):
    """x: (B, obs_dim) f32, packed: pack_params(...) -> value: (B, 1) f32."""
    B, D = x.shape
    assert D == obs_dim
    layout = _packed_layout(obs_dim, hidden_dim)
    rows, lane = layout[3], layout[4]

    # Feature-major view: batch on the lane axis.
    # TODO(synk): have the producer hand us x already as (obs_dim, B) to skip this pass.
    xt = x.T                                           # (D, B)

    tb, num_tiles = _choose_tile(B, block_b)

    # Scoped-VMEM request from PHYSICAL (padded) tile sizes; capped at v7x's 64 MiB.
    tb_pad = _round_up(tb, 128)
    xt_tile = _round_up(D, 8) * tb_pad * 4
    out_tile = 8 * tb_pad * 4
    act_tile = _round_up(hidden_dim, 8) * tb_pad * 4
    param_buf = rows * _round_up(lane, 128) * 4
    per_step = 2 * xt_tile + 2 * out_tile + 2 * param_buf + 6 * act_tile
    vmem_limit = int(min(max(per_step + (2 << 20), 4 << 20), 64 << 20))

    kernel = functools.partial(
        _critic_mlp_kernel, d_obs=D, hidden=hidden_dim, layout=layout)

    out = pl.pallas_call(
        kernel,
        out_shape=jax.ShapeDtypeStruct((1, B), jnp.float32),
        grid_spec=pltpu.PrefetchScalarGridSpec(
            num_scalar_prefetch=0,
            grid=(num_tiles,),
            in_specs=[
                # x^T batch tile (dense DMA: 16 contiguous rows of TB lanes each).
                pl.BlockSpec((D, tb), lambda i: (0, i)),
                # Packed params: constant index_map -> VMEM-resident across the grid.
                pl.BlockSpec((rows, lane), lambda i: (0, 0)),
            ],
            # Lane-dense output tile (TB multiple of 128 for large B).
            out_specs=pl.BlockSpec((1, tb), lambda i: (0, i)),
        ),
        compiler_params=pltpu.CompilerParams(
            dimension_semantics=("parallel",),
            vmem_limit_bytes=vmem_limit,
        ),
    )(xt, packed)
    return out.reshape(B, 1)


# ------------------------- deterministic parameter init ----------------------
def _orthogonal(key, rows, cols, gain=1.0):
    """Orthogonal init (same semantics as nn.init.orthogonal_), deterministic."""
    a = jax.random.normal(key, (max(rows, cols), min(rows, cols)), jnp.float32)
    q, r = jnp.linalg.qr(a)
    d = jnp.diag(r)
    q = q * jnp.where(d >= 0, 1.0, -1.0)               # sign fix (never zero)
    if rows < cols:
        q = q.T
    return gain * q[:rows, :cols]


def make_params(key, obs_dim, hidden_dim):
    k1, k2, k3 = jax.random.split(key, 3)
    # torch Linear weight is (out, in); we store (in, out) so math matches x @ W + b.
    w1 = _orthogonal(k1, obs_dim, hidden_dim)          # fc1.weight.T
    b1 = jnp.zeros((1, hidden_dim), jnp.float32)
    w2 = _orthogonal(k2, hidden_dim, hidden_dim)       # fc2.weight.T
    b2 = jnp.zeros((1, hidden_dim), jnp.float32)
    w3 = _orthogonal(k3, hidden_dim, 1)                # fc3.weight.T
    b3 = jnp.zeros((1, 1), jnp.float32)
    return (w1, b1, w2, b2, w3, b3)


def _reference(x, params):
    w1, b1, w2, b2, w3, b3 = params
    h = jnp.tanh(x @ w1 + b1)
    h = jnp.tanh(h @ w2 + b2)
    return h @ w3 + b3


# --------------------------------- main ---------------------------------------
if __name__ == "__main__":
    obs_dim, hidden_dim, batch = 16, 32, 8

    key = jax.random.PRNGKey(0)
    k_x, k_p, k_big = jax.random.split(key, 3)
    params = make_params(k_p, obs_dim, hidden_dim)
    packed = pack_params(params, obs_dim, hidden_dim)   # packed ONCE, reused every call

    # Small batch: single full-extent tile.
    x = jax.random.normal(k_x, (batch, obs_dim), jnp.float32)
    value = jax.block_until_ready(
        critic_mlp_forward(x, packed, obs_dim=obs_dim, hidden_dim=hidden_dim))
    ref = _reference(x, params)
    assert value.shape == (batch, 1)
    assert jnp.allclose(value, ref, atol=1e-5, rtol=1e-5)

    # Larger, non-multiple-of-128 batch: multi-step "parallel" grid with a ragged
    # (unpadded) last tile.
    x_big = jax.random.normal(k_big, (300, obs_dim), jnp.float32)
    value_big = jax.block_until_ready(
        critic_mlp_forward(x_big, packed, obs_dim=obs_dim, hidden_dim=hidden_dim,
                           block_b=128))
    ref_big = _reference(x_big, params)
    assert value_big.shape == (300, 1)
    assert jnp.allclose(value_big, ref_big, atol=1e-5, rtol=1e-5)

    print("KERNEL_OK")
</pallas_src>

<mosaic_0001>
module attributes {stable_mosaic.version = 11 : i64} {
  func.func @_critic_mlp_kernel(%arg0: i32, %arg1: memref<16x8xf32, #tpu.memory_space<vmem>>, %arg2: memref<96x32xf32, #tpu.memory_space<vmem>>, %arg3: memref<1x8xf32, #tpu.memory_space<vmem>>) attributes {dimension_semantics = [#tpu.dimension_semantics<parallel>], iteration_bounds = array<i64: 1>, scalar_prefetch = 0 : i64, scratch_operands = 0 : i64, tpu.core_type = #tpu.core_type<tc>, window_params = [{transform_indices = @transform_0, window_bounds = array<i64: 16, 8>}, {pipeline_mode = #tpu.pipeline_mode<synchronous>, transform_indices = @transform_1, window_bounds = array<i64: 96, 32>}, {transform_indices = @transform_2, window_bounds = array<i64: 1, 8>}]} {
    %c0 = arith.constant 0 : index
    %c0_0 = arith.constant 0 : index
    %0 = vector.load %arg1[%c0, %c0_0] : memref<16x8xf32, #tpu.memory_space<vmem>>, vector<16x8xf32>
    %c0_1 = arith.constant 0 : index
    %c0_2 = arith.constant 0 : index
    %1 = vector.load %arg2[%c0_1, %c0_2] : memref<96x32xf32, #tpu.memory_space<vmem>>, vector<32x16xf32>
    %c32 = arith.constant 32 : index
    %c0_3 = arith.constant 0 : index
    %2 = vector.load %arg2[%c32, %c0_3] : memref<96x32xf32, #tpu.memory_space<vmem>>, vector<32x32xf32>
    %c64 = arith.constant 64 : index
    %c0_4 = arith.constant 0 : index
    %3 = vector.load %arg2[%c64, %c0_4] : memref<96x32xf32, #tpu.memory_space<vmem>>, vector<32x1xf32>
    %c64_5 = arith.constant 64 : index
    %c1 = arith.constant 1 : index
    %4 = vector.load %arg2[%c64_5, %c1] : memref<96x32xf32, #tpu.memory_space<vmem>>, vector<32x1xf32>
    %c64_6 = arith.constant 64 : index
    %c2 = arith.constant 2 : index
    %5 = vector.load %arg2[%c64_6, %c2] : memref<96x32xf32, #tpu.memory_space<vmem>>, vector<32x1xf32>
    %c64_7 = arith.constant 64 : index
    %c3 = arith.constant 3 : index
    %6 = vector.load %arg2[%c64_7, %c3] : memref<96x32xf32, #tpu.memory_space<vmem>>, vector<1x1xf32>
    %cst = arith.constant dense<0.000000e+00> : vector<32x8xf32>
    %7 = tpu.matmul %1, %0, %cst {dimension_numbers = #tpu.dot_dimension_numbers<[1], [0], [0], [1], [0, 0, 1, 1], [], []>} : vector<32x16xf32>, vector<16x8xf32>, vector<32x8xf32> -> vector<32x8xf32>
    %8 = vector.broadcast %3 : vector<32x1xf32> to vector<32x8xf32>
    %9 = arith.addf %7, %8 : vector<32x8xf32>
    %10 = math.tanh %9 : vector<32x8xf32>
    %cst_8 = arith.constant dense<0.000000e+00> : vector<32x8xf32>
    %11 = tpu.matmul %2, %10, %cst_8 {dimension_numbers = #tpu.dot_dimension_numbers<[1], [0], [0], [1], [0, 0, 1, 1], [], []>} : vector<32x32xf32>, vector<32x8xf32>, vector<32x8xf32> -> vector<32x8xf32>
    %12 = vector.broadcast %4 : vector<32x1xf32> to vector<32x8xf32>
    %13 = arith.addf %11, %12 : vector<32x8xf32>
    %14 = math.tanh %13 : vector<32x8xf32>
    %15 = vector.broadcast %5 : vector<32x1xf32> to vector<32x8xf32>
    %16 = arith.mulf %14, %15 : vector<32x8xf32>
    %cst_9 = arith.constant dense<0.000000e+00> : vector<8xf32>
    %17 = vector.multi_reduction <add>, %16, %cst_9 [0] : vector<32x8xf32> to vector<8xf32>
    %18 = vector.shape_cast %17 : vector<8xf32> to vector<1x8xf32>
    %19 = vector.broadcast %6 : vector<1x1xf32> to vector<1x8xf32>
    %20 = arith.addf %18, %19 : vector<1x8xf32>
    %c0_10 = arith.constant 0 : index
    %c0_11 = arith.constant 0 : index
    %21 = vector.load %arg3[%c0_10, %c0_11] : memref<1x8xf32, #tpu.memory_space<vmem>>, vector<1x8xf32>
    tpu.vector_store %arg3[%c0_10, %c0_11], %20 {strides = array<i32>} : memref<1x8xf32, #tpu.memory_space<vmem>>, vector<1x8xf32>,
    return
  }
  func.func @transform_0(%arg0: i32) -> (i32, i32) {
    %c0_i32 = arith.constant 0 : i32
    %c0_i32_0 = arith.constant 0 : i32
    return %c0_i32, %arg0 : i32, i32
  }
  func.func @transform_1(%arg0: i32) -> (i32, i32) {
    %c0_i32 = arith.constant 0 : i32
    %c0_i32_0 = arith.constant 0 : i32
    %c0_i32_1 = arith.constant 0 : i32
    return %c0_i32, %c0_i32_0 : i32, i32
  }
  func.func @transform_2(%arg0: i32) -> (i32, i32) {
    %c0_i32 = arith.constant 0 : i32
    %c0_i32_0 = arith.constant 0 : i32
    return %c0_i32, %arg0 : i32, i32
  }
}

</mosaic_0001>

<llo_original>
// kernel: critic_mlp_forward.1
$region0: #{critic_mlp_forward.1}
  #allocation0 [shape = 'u32[]', space=smem, size = 0x4, offset = 0x4, fixed_abs, tag = 'smem constant byte address 0x4 - core index']
  #allocation1 [shape = 'u32[144,128]{1,0:T(1,128)}', space=vmem, size = 0x12000, scoped, tag = 'internal scratch']
  %s0 = inlined_call_operand.vmem [shape: f32[16,8], index: 0, kind: input, shape index: {}]
  %s1 = inlined_call_operand.vmem [shape: f32[96,32], index: 1, kind: input, shape index: {}]
  %s2 = inlined_call_operand.hbm [shape: f32[1,8], index: 2, kind: output, shape index: {}]
  %s3 = sld [smem:[#allocation0]]
  $region18: #{critic_mlp_forward.1} parent=0
    _
  %s5 = ssub.s32 1, %s3
  %s6 = scalar_select 0, %s5, %s3
  $region1: #{critic_mlp_forward.1} parent=0
    #allocation2 [shape = 'u8[512]{0}', space=vmem, size = 0x400, scoped, tag = 'output window, operand 0, single buffered']
    #allocation3 [shape = 's32[1]{0}', space=sflag, size = 0x4, scoped, tag = 'scoped memory for critic_mlp_forward.1']
    %7 = vsyncpa [#allocation3], 0
    // Predicated region
    $region2: #{critic_mlp_forward.1} parent=1 // pred_check
      _
    $region3: #{critic_mlp_forward.1} parent=1 // pred_check_branch
      %9 = sbr.rel (0) target = $region5
    $region4: #{critic_mlp_forward.1} parent=1 // pred_region
      _
    $region5: #{critic_mlp_forward.1} parent=1 // pred_fallthru
      _
    // Predicated region
    $region6: #{critic_mlp_forward.1} parent=1 // pred_check
      _
    $region7: #{critic_mlp_forward.1} parent=1 // pred_check_branch
      %11 = sbr.rel (0) target = $region9
    $region8: #{critic_mlp_forward.1} parent=1 // pred_region
      _
    $region9: #{critic_mlp_forward.1} parent=1 // pred_fallthru
      _
    %v12 = vld [vmem:[%s0] sm:$0xff]
    %v13 = vld [vmem:[%s0 + $0x8] sm:$0xff]
    %v14 = vld [vmem:[%s1] sm:$0xff]
    %v15 = vld [vmem:[%s1 + $0x8] sm:$0xff]
    %v16 = vld [vmem:[%s1 + $0x10] sm:$0xff]
    %v17 = vld [vmem:[%s1 + $0x18] sm:$0xff]
    %v18 = vld [vmem:[%s1 + $0x20] sm:$0xff]
    %v19 = vld [vmem:[%s1 + $0x28] sm:$0xff]
    %v20 = vld [vmem:[%s1 + $0x30] sm:$0xff]
    %v21 = vld [vmem:[%s1 + $0x38] sm:$0xff]
    %v22 = vld [vmem:[%s1 + $0x40] sm:$0xff]
    %v23 = vld [vmem:[%s1 + $0x48] sm:$0xff]
    %v24 = vld [vmem:[%s1 + $0x50] sm:$0xff]
    %v25 = vld [vmem:[%s1 + $0x58] sm:$0xff]
    %v26 = vld [vmem:[%s1 + $0x40] sm:$0x1]
    %28 = vset.pattern.permute.xlu0 0
    %29 = vperm.xlu0 %28, %v22
    %v30 = vpop.permute.xlu0 %29
    %33 = vset.pattern.permute.xlu0 0
    %34 = vperm.xlu0 %33, %v23
    %v35 = vpop.permute.xlu0 %34
    %38 = vset.pattern.permute.xlu0 0
    %39 = vperm.xlu0 %38, %v24
    %v40 = vpop.permute.xlu0 %39
    %43 = vset.pattern.permute.xlu0 0
    %44 = vperm.xlu0 %43, %v25
    %v45 = vpop.permute.xlu0 %44
    %vm47 = vcmask 130048
    %v49 = vsel %vm47, %v14, 0
    %v52 = vsel %vm47, %v15, 0
    %v55 = vsel %vm47, %v16, 0
    %v58 = vsel %vm47, %v17, 0
    %60 = vmatprep.subr.mxu0 0.0
    %61 = vmatpush1.msra.mxu0 %v12
    %62 = vmatprep.subr.mxu0 0.0
    %63 = vmatpush1.msra.mxu0 %v13
    %64 = vmatprep.subr.mxu0 0.0
    %65 = vmatpush1.msra.mxu0 0.0
    %66 = vmatprep.subr.mxu0 0.0
    %67 = vmatpush1.msra.mxu0 0.0
    %68 = vmatprep.subr.mxu0 0.0
    %69 = vmatpush1.msra.mxu0 0.0
    %70 = vmatprep.subr.mxu0 0.0
    %71 = vmatpush1.msra.mxu0 0.0
    %72 = vmatprep.subr.mxu0 0.0
    %73 = vmatpush1.msra.mxu0 0.0
    %74 = vmatprep.subr.mxu0 0.0
    %75 = vmatpush1.msra.mxu0 0.0
    %76 = vmatprep.subr.mxu0 0.0
    %77 = vmatpush1.msra.mxu0 0.0
    %78 = vmatprep.subr.mxu0 0.0
    %79 = vmatpush1.msra.mxu0 0.0
    %80 = vmatprep.subr.mxu0 0.0
    %81 = vmatpush1.msra.mxu0 0.0
    %82 = vmatprep.subr.mxu0 0.0
    %83 = vmatpush1.msra.mxu0 0.0
    %84 = vmatprep.subr.mxu0 0.0
    %85 = vmatpush1.msra.mxu0 0.0
    %86 = vmatprep.subr.mxu0 0.0
    %87 = vmatpush1.msra.mxu0 0.0
    %88 = vmatprep.subr.mxu0 0.0
    %89 = vmatpush1.msra.mxu0 0.0
    %90 = vmatprep.subr.mxu0 0.0
    %91 = vmatpush1.msra.mxu0 0.0
    %92 = vmatprep.subr.mxu0 0.0
    %93 = vmatpush1.msra.mxu0 0.0
    %94 = vmatprep.subr.mxu0 0.0
    %95 = vmatpush1.msra.mxu0 0.0
    %96 = vmatprep.subr.mxu0 0.0
    %97 = vmatpush1.msra.mxu0 0.0
    %98 = vmatprep.subr.mxu0 0.0
    %99 = vmatpush1.msra.mxu0 0.0
    %100 = vmatprep.subr.mxu0 0.0
    %101 = vmatpush1.msra.mxu0 0.0
    %102 = vmatprep.subr.mxu0 0.0
    %103 = vmatpush1.msra.mxu0 0.0
    %104 = vmatprep.subr.mxu0 0.0
    %105 = vmatpush1.msra.mxu0 0.0
    %106 = vmatprep.subr.mxu0 0.0
    %107 = vmatpush1.msra.mxu0 0.0
    %108 = vmatprep.subr.mxu0 0.0
    %109 = vmatpush1.msra.mxu0 0.0
    %110 = vmatprep.subr.mxu0 0.0
    %111 = vmatpush1.msra.mxu0 0.0
    %112 = vmatprep.subr.mxu0 0.0
    %113 = vmatpush1.msra.mxu0 0.0
    %114 = vmatprep.subr.mxu0 0.0
    %115 = vmatpush1.msra.mxu0 0.0
    %116 = vmatprep.subr.mxu0 0.0
    %117 = vmatpush1.msra.mxu0 0.0
    %118 = vmatprep.subr.mxu0 0.0
    %119 = vmatpush1.msra.mxu0 0.0
    %120 = vmatprep.subr.mxu0 0.0
    %121 = vmatpush1.msra.mxu0 0.0
    %122 = vmatprep.subr.mxu0 0.0
    %123 = vmatpush1.msra.mxu0 0.0
    %124 = vmatprep.mubr.f32.mxu0 0.0
    %125 = vmatmul.mubr.f32.gmra.mrb[0].mxu0 %v49
    %v126 = vpop.f32.mrb[0].mxu0
    %v127 = vadd.f32 %v30, %v126
    %v128 = vpop.f32.mrb[0].mxu0
    %129 = vmatprep.mubr.f32.mxu0 0.0
    %130 = vmatmul.mubr.f32.gmra.mrb[0].mxu0 %v52
    %v131 = vpop.f32.mrb[0].mxu0
    %v132 = vadd.f32 %v35, %v131
    %v133 = vpop.f32.mrb[0].mxu0
    %134 = vmatprep.mubr.f32.mxu0 0.0
    %135 = vmatmul.mubr.f32.gmra.mrb[0].mxu0 %v55
    %v136 = vpop.f32.mrb[0].mxu0
    %v137 = vadd.f32 %v40, %v136
    %v138 = vpop.f32.mrb[0].mxu0
    %139 = vmatprep.mubr.f32.mxu0 0.0
    %140 = vmatmul.mubr.f32.gmra.mrb[0].mxu0 %v58
    %v141 = vpop.f32.mrb[0].mxu0
    %v142 = vadd.f32 %v45, %v141
    %v143 = vpop.f32.mrb[0].mxu0
    %144 = vdwg.mxu0
    %v145 = vtanh.pop %v127
    %v146 = vtanh.pop %v132
    %v147 = vtanh.pop %v137
    %v148 = vtanh.pop %v142
    %149 = vset.pattern.permute.xlu0 1
    %150 = vperm.xlu0 %149, %v22
    %v151 = vpop.permute.xlu0 %150
    %153 = vset.pattern.permute.xlu0 1
    %154 = vperm.xlu0 %153, %v23
    %v155 = vpop.permute.xlu0 %154
    %157 = vset.pattern.permute.xlu0 1
    %158 = vperm.xlu0 %157, %v24
    %v159 = vpop.permute.xlu0 %158
    %161 = vset.pattern.permute.xlu0 1
    %162 = vperm.xlu0 %161, %v25
    %v163 = vpop.permute.xlu0 %162
    %vm165 = vcmask 261120
    %v167 = vsel %vm165, %v18, 0
    %v170 = vsel %vm165, %v19, 0
    %v173 = vsel %vm165, %v20, 0
    %v176 = vsel %vm165, %v21, 0
    %178 = vmatprep.subr.mxu0 0.0
    %179 = vmatpush1.msra.mxu0 %v145
    %180 = vmatprep.subr.mxu0 0.0
    %181 = vmatpush1.msra.mxu0 %v146
    %182 = vmatprep.subr.mxu0 0.0
    %183 = vmatpush1.msra.mxu0 %v147
    %184 = vmatprep.subr.mxu0 0.0
    %185 = vmatpush1.msra.mxu0 %v148
    %186 = vmatprep.subr.mxu0 0.0
    %187 = vmatpush1.msra.mxu0 0.0
    %188 = vmatprep.subr.mxu0 0.0
    %189 = vmatpush1.msra.mxu0 0.0
    %190 = vmatprep.subr.mxu0 0.0
    %191 = vmatpush1.msra.mxu0 0.0
    %192 = vmatprep.subr.mxu0 0.0
    %193 = vmatpush1.msra.mxu0 0.0
    %194 = vmatprep.subr.mxu0 0.0
    %195 = vmatpush1.msra.mxu0 0.0
    %196 = vmatprep.subr.mxu0 0.0
    %197 = vmatpush1.msra.mxu0 0.0
    %198 = vmatprep.subr.mxu0 0.0
    %199 = vmatpush1.msra.mxu0 0.0
    %200 = vmatprep.subr.mxu0 0.0
    %201 = vmatpush1.msra.mxu0 0.0
    %202 = vmatprep.subr.mxu0 0.0
    %203 = vmatpush1.msra.mxu0 0.0
    %204 = vmatprep.subr.mxu0 0.0
    %205 = vmatpush1.msra.mxu0 0.0
    %206 = vmatprep.subr.mxu0 0.0
    %207 = vmatpush1.msra.mxu0 0.0
    %208 = vmatprep.subr.mxu0 0.0
    %209 = vmatpush1.msra.mxu0 0.0
    %210 = vmatprep.subr.mxu0 0.0
    %211 = vmatpush1.msra.mxu0 0.0
    %212 = vmatprep.subr.mxu0 0.0
    %213 = vmatpush1.msra.mxu0 0.0
    %214 = vmatprep.subr.mxu0 0.0
    %215 = vmatpush1.msra.mxu0 0.0
    %216 = vmatprep.subr.mxu0 0.0
    %217 = vmatpush1.msra.mxu0 0.0
    %218 = vmatprep.subr.mxu0 0.0
    %219 = vmatpush1.msra.mxu0 0.0
    %220 = vmatprep.subr.mxu0 0.0
    %221 = vmatpush1.msra.mxu0 0.0
    %222 = vmatprep.subr.mxu0 0.0
    %223 = vmatpush1.msra.mxu0 0.0
    %224 = vmatprep.subr.mxu0 0.0
    %225 = vmatpush1.msra.mxu0 0.0
    %226 = vmatprep.subr.mxu0 0.0
    %227 = vmatpush1.msra.mxu0 0.0
    %228 = vmatprep.subr.mxu0 0.0
    %229 = vmatpush1.msra.mxu0 0.0
    %230 = vmatprep.subr.mxu0 0.0
    %231 = vmatpush1.msra.mxu0 0.0
    %232 = vmatprep.subr.mxu0 0.0
    %233 = vmatpush1.msra.mxu0 0.0
    %234 = vmatprep.subr.mxu0 0.0
    %235 = vmatpush1.msra.mxu0 0.0
    %236 = vmatprep.subr.mxu0 0.0
    %237 = vmatpush1.msra.mxu0 0.0
    %238 = vmatprep.subr.mxu0 0.0
    %239 = vmatpush1.msra.mxu0 0.0
    %240 = vmatprep.subr.mxu0 0.0
    %241 = vmatpush1.msra.mxu0 0.0
    %242 = vmatprep.mubr.f32.mxu0 0.0
    %243 = vmatmul.mubr.f32.gmra.mrb[0].mxu0 %v167
    %v244 = vpop.f32.mrb[0].mxu0
    %v245 = vadd.f32 %v151, %v244
    %v246 = vpop.f32.mrb[0].mxu0
    %247 = vmatprep.mubr.f32.mxu0 0.0
    %248 = vmatmul.mubr.f32.gmra.mrb[0].mxu0 %v170
    %v249 = vpop.f32.mrb[0].mxu0
    %v250 = vadd.f32 %v155, %v249
    %v251 = vpop.f32.mrb[0].mxu0
    %252 = vmatprep.mubr.f32.mxu0 0.0
    %253 = vmatmul.mubr.f32.gmra.mrb[0].mxu0 %v173
    %v254 = vpop.f32.mrb[0].mxu0
    %v255 = vadd.f32 %v159, %v254
    %v256 = vpop.f32.mrb[0].mxu0
    %257 = vmatprep.mubr.f32.mxu0 0.0
    %258 = vmatmul.mubr.f32.gmra.mrb[0].mxu0 %v176
    %v259 = vpop.f32.mrb[0].mxu0
    %v260 = vadd.f32 %v163, %v259
    %v261 = vpop.f32.mrb[0].mxu0
    %262 = vdwg.mxu0
    %v263 = vtanh.pop %v245
    %v264 = vtanh.pop %v250
    %v265 = vtanh.pop %v255
    %v266 = vtanh.pop %v260
    %267 = vset.pattern.permute.xlu0 2
    %268 = vperm.xlu0 %267, %v22
    %v269 = vpop.permute.xlu0 %268
    %271 = vset.pattern.permute.xlu0 2
    %272 = vperm.xlu0 %271, %v23
    %v273 = vpop.permute.xlu0 %272
    %275 = vset.pattern.permute.xlu0 2
    %276 = vperm.xlu0 %275, %v24
    %v277 = vpop.permute.xlu0 %276
    %279 = vset.pattern.permute.xlu0 2
    %280 = vperm.xlu0 %279, %v25
    %v281 = vpop.permute.xlu0 %280
    %v283 = vmul.f32 %v263, %v269
    %v284 = vmul.f32 %v264, %v273
    %v285 = vmul.f32 %v265, %v277
    %v286 = vmul.f32 %v266, %v281
    %vm287 = vcmask 64512
    %v288 = vsel %vm287, %v283, 0.0
    %v289 = vsel %vm287, %v284, 0.0
    %v290 = vadd.f32 %v288, %v289
    %v291 = vsel %vm287, %v285, 0.0
    %v292 = vadd.f32 %v290, %v291
    %v293 = vsel %vm287, %v286, 0.0
    %v294 = vadd.f32 %v292, %v293
    %v295 = vrot.slane %v294, 4
    %v296 = vadd.f32 %v294, %v295
    %v297 = vrot.slane %v296, 2
    %v298 = vadd.f32 %v296, %v297
    %v299 = vrot.slane %v298, 1
    %v300 = vadd.f32 %v298, %v299
    %302 = vset.pattern.permute.xlu0 3
    %303 = vperm.xlu0 %302, %v26
    %v304 = vpop.permute.xlu0 %303
    %v306 = vadd.f32 %v300, %v304
    %vm307 = vcmask 57344
    %308 = vst.msk [vmem:[#allocation2] sm:$0x1] %vm307, %v306
    // Predicated region
    $region10: #{critic_mlp_forward.1} parent=1 // pred_check
      _
    $region11: #{critic_mlp_forward.1} parent=1 // pred_check_branch
      %310 = sbr.rel (0) target = $region13
    $region12: #{critic_mlp_forward.1} parent=1 // pred_region
      %s312 = ssub.s32 16, 16
      %313 = vsyncadd [#allocation3], %s312
      %s315 = sshll.u32 [#allocation2], 4
      %s316 = int_to_ptr.vmem [resolvable:$true] %s315
      %318 = dma.vmem_to_hbm [thread:$0]  %s316, 16, %s2, [#allocation3]
    $region13: #{critic_mlp_forward.1} parent=1 // pred_fallthru
      _
    // Predicated region
    $region14: #{critic_mlp_forward.1} parent=1 // pred_check
      _
    $region15: #{critic_mlp_forward.1} parent=1 // pred_check_branch
      %320 = sbr.rel (0) target = $region17
    $region16: #{critic_mlp_forward.1} parent=1 // pred_region
      %321 = dma.done [#allocation3], 16
    $region17: #{critic_mlp_forward.1} parent=1 // pred_fallthru
      _
    %322 = vsyncpa [#allocation3], 1

</llo_original>
